<compile_context>
chip_gen: v6e
topology: v6e:2x2x1
jax: 0.10.0
libtpu: 0.0.40
codegen_flags: <defaults>
</compile_context>

<pallas_src>
import functools

import jax
import jax.numpy as jnp
from jax.experimental import pallas as pl
from jax.experimental.pallas import tpu as pltpu


def agfw_kernel(b_ref, s_ref, e_ref, p_ref, x_ref, o_ref, *, num_regions):
    """One grid step processes a tile of TN frames.

    b_ref : SMEM f32[1]        linear bias
    s_ref : VMEM [RD, RP]      score matrix,   S[r*D+d, r] = w[d]   (x.dtype)
    e_ref : VMEM f32[RP, RD]   expand matrix,  E[r, r*D+d] = 1
    p_ref : VMEM f32[RD, D]    pool matrix,    P[r*D+d, d] = 1
    x_ref : VMEM [TN, RD]      input features, regions flattened onto lanes
    o_ref : VMEM [TN, D]       weighted-average output
    """
    x = x_ref[...]                                                   # [TN, RD]

    # Attention scores for every region via one MXU matmul:
    #   scores[n, r] = <x[n, r*D:(r+1)*D], w> + b
    scores = jnp.dot(x, s_ref[...],
                     preferred_element_type=jnp.float32) + b_ref[0]  # [TN, RP]

    # Mask the lane padding (columns >= num_regions) out of the softmax.
    col = jax.lax.broadcasted_iota(jnp.int32, scores.shape, 1)
    scores = jnp.where(col < num_regions, scores, jnp.float32(-1e30))

    # Numerically-stable softmax over regions, kept unnormalized; we divide
    # once at the end on the (smaller) [TN, D] result.
    m = jnp.max(scores, axis=-1, keepdims=True)                      # [TN, 1]
    e = jnp.exp(scores - m)                                          # [TN, RP]
    denom = jnp.sum(e, axis=-1, keepdims=True)                       # [TN, 1]

    # Broadcast the (unnormalized) region weights across that region's D
    # lanes with an MXU matmul, multiply by x, then segmented-sum over the
    # regions back down to D lanes with another matmul.
    wexp = jnp.dot(e, e_ref[...], preferred_element_type=jnp.float32)     # [TN, RD]
    prod = wexp * x                                                  # [TN, RD] f32
    out = jnp.dot(prod, p_ref[...], preferred_element_type=jnp.float32)   # [TN, D]

    out = out * pl.reciprocal(denom, approx=True)                    # EUP slot, ~free
    o_ref[...] = out.astype(o_ref.dtype)


def _round_up(n, m):
    return ((n + m - 1) // m) * m


@functools.partial(jax.jit, static_argnames=("tile_n",))
def agfw_forward(x, w, b, *, tile_n=1024):
    """x: [B, T, R, D], w: [1, D], b: [1]  ->  [B, T, D]"""
    B, T, R, D = x.shape
    N = B * T
    RD = R * D
    RP = _round_up(R, 128)   # pad the region axis of the score matmul to full lanes

    x2 = x.reshape(N, RD)    # frame-major; regions*features on the lane axis (free)

    # Frame tile: as large as reasonable (mem-bound), multiple of 8 (sublane
    # rule) unless it covers all frames.  Ragged tail handled by the cdiv grid.
    if tile_n >= N:
        tn = N
    else:
        tn = max(8, (min(tile_n, N) // 8) * 8)
    grid = (pl.cdiv(N, tn),)

    # Tiny constant helper matrices (each at most ~[RD, 128] f32).
    wv = w.reshape(-1).astype(jnp.float32)                   # [D]
    k = jnp.arange(RD, dtype=jnp.int32)
    r_of_k = k // D                                          # region id of lane k
    d_of_k = k % D                                           # feature id of lane k
    # S[k, r] = w[k % D] if r == k // D else 0                -> [RD, RP]
    S = (wv[d_of_k][:, None]
         * (r_of_k[:, None] == jnp.arange(RP)[None, :])).astype(x.dtype)
    # E[r, k] = 1 if r == k // D else 0                       -> [RP, RD]
    E = (jnp.arange(RP)[:, None] == r_of_k[None, :]).astype(jnp.float32)
    # P[k, d] = 1 if d == k % D else 0                        -> [RD, D]
    P = (d_of_k[:, None] == jnp.arange(D)[None, :]).astype(jnp.float32)

    bias = b.reshape(-1).astype(jnp.float32)                 # [1]

    out = pl.pallas_call(
        functools.partial(agfw_kernel, num_regions=R),
        out_shape=jax.ShapeDtypeStruct((N, D), x.dtype),
        grid=grid,
        in_specs=[
            pl.BlockSpec(memory_space=pltpu.SMEM),           # bias  [1]
            pl.BlockSpec((RD, RP), lambda i: (0, 0)),        # S
            pl.BlockSpec((RP, RD), lambda i: (0, 0)),        # E
            pl.BlockSpec((RD, D), lambda i: (0, 0)),         # P
            pl.BlockSpec((tn, RD), lambda i: (i, 0)),        # x tile (lane-dense)
        ],
        out_specs=pl.BlockSpec((tn, D), lambda i: (i, 0)),
        compiler_params=pltpu.CompilerParams(
            dimension_semantics=("parallel",)),
    )(bias, S, E, P, x2)

    return out.reshape(B, T, D)


def agfw_reference(x, w, b):
    """Pure-JAX reference mirroring the PyTorch module (full f32 precision)."""
    xf = x.astype(jnp.float32)
    scores = jnp.einsum("btrd,d->btr", xf, w.reshape(-1).astype(jnp.float32),
                        precision=jax.lax.Precision.HIGHEST) + b[0]
    weights = jax.nn.softmax(scores, axis=-1)
    out = jnp.einsum("btr,btrd->btd", weights, xf,
                     precision=jax.lax.Precision.HIGHEST)
    return out.astype(x.dtype)


if __name__ == "__main__":
    # small shapes consistent with the module: batch=2, chunk=8, regions=4, D=32
    B, T, R, D = 2, 8, 4, 32
    key = jax.random.PRNGKey(0)
    kx, kw, kb = jax.random.split(key, 3)

    x = jax.random.normal(kx, (B, T, R, D), dtype=jnp.float32)
    # deterministic "Linear(D, 1)" parameters (w stored as [1, D], b as [1])
    w = jax.random.normal(kw, (1, D), dtype=jnp.float32) * 0.1
    b = jax.random.normal(kb, (1,), dtype=jnp.float32) * 0.1

    out = agfw_forward(x, w, b)
    out = jax.block_until_ready(out)
    assert out.shape == (B, T, D)

    ref = agfw_reference(x, w, b)
    # Tolerance covers the worst case of reduced-precision (bf16-pass) f32
    # MXU matmuls on some generations / precision defaults; with full-f32
    # passes the observed error is ~1e-6.
    assert jnp.allclose(out, ref, atol=2e-2, rtol=2e-2), "mismatch vs reference"

    # Structural check: the output is a convex combination over regions, so
    # each feature must lie (up to matmul rounding) inside the per-frame
    # [min_r, max_r] envelope of the inputs.
    lo = x.min(axis=2) - 2e-2
    hi = x.max(axis=2) + 2e-2
    assert bool(jnp.all((out >= lo) & (out <= hi))), "output not a convex combo"

    print("KERNEL_OK")
</pallas_src>

<mosaic_0001>
module attributes {stable_mosaic.version = 11 : i64} {
  func.func @agfw_kernel(%arg0: i32, %arg1: memref<1xf32, #tpu.memory_space<smem>>, %arg2: memref<128x128xf32, #tpu.memory_space<vmem>>, %arg3: memref<128x128xf32, #tpu.memory_space<vmem>>, %arg4: memref<128x32xf32, #tpu.memory_space<vmem>>, %arg5: memref<16x128xf32, #tpu.memory_space<vmem>>, %arg6: memref<16x32xf32, #tpu.memory_space<vmem>>) attributes {dimension_semantics = [#tpu.dimension_semantics<parallel>], iteration_bounds = array<i64: 1>, scalar_prefetch = 0 : i64, scratch_operands = 0 : i64, tpu.core_type = #tpu.core_type<tc>, window_params = [{transform_indices = @transform_0, window_bounds = array<i64: 1>}, {pipeline_mode = #tpu.pipeline_mode<synchronous>, transform_indices = @transform_1, window_bounds = array<i64: 128, 128>}, {pipeline_mode = #tpu.pipeline_mode<synchronous>, transform_indices = @transform_2, window_bounds = array<i64: 128, 128>}, {pipeline_mode = #tpu.pipeline_mode<synchronous>, transform_indices = @transform_3, window_bounds = array<i64: 128, 32>}, {transform_indices = @transform_4, window_bounds = array<i64: 16, 128>}, {transform_indices = @transform_5, window_bounds = array<i64: 16, 32>}]} {
    %c0 = arith.constant 0 : index
    %c0_0 = arith.constant 0 : index
    %0 = vector.load %arg5[%c0, %c0_0] : memref<16x128xf32, #tpu.memory_space<vmem>>, vector<16x128xf32>
    %c0_1 = arith.constant 0 : index
    %c0_2 = arith.constant 0 : index
    %1 = vector.load %arg2[%c0_1, %c0_2] : memref<128x128xf32, #tpu.memory_space<vmem>>, vector<128x128xf32>
    %cst = arith.constant dense<0.000000e+00> : vector<16x128xf32>
    %2 = tpu.matmul %0, %1, %cst {dimension_numbers = #tpu.dot_dimension_numbers<[1], [0], [0], [1], [0, 0, 1, 1], [], []>} : vector<16x128xf32>, vector<128x128xf32>, vector<16x128xf32> -> vector<16x128xf32>
    %c0_3 = arith.constant 0 : index
    %3 = memref.load %arg1[%c0_3] : memref<1xf32, #tpu.memory_space<smem>>
    %4 = vector.broadcast %3 : f32 to vector<16x128xf32>
    %5 = arith.addf %2, %4 : vector<16x128xf32>
    %6 = tpu.iota {dimensions = array<i32: 1>} : vector<16x128xi32>
    %c4_i32 = arith.constant 4 : i32
    %7 = vector.broadcast %c4_i32 : i32 to vector<16x128xi32>
    %8 = arith.cmpi slt, %6, %7 : vector<16x128xi32>
    %cst_4 = arith.constant -1.000000e+30 : f32
    %9 = vector.broadcast %cst_4 : f32 to vector<16x128xf32>
    %10 = arith.select %8, %5, %9 : vector<16x128xi1>, vector<16x128xf32>
    %cst_5 = arith.constant dense<0xFF800000> : vector<16xf32>
    %11 = vector.multi_reduction <maximumf>, %10, %cst_5 [1] : vector<16x128xf32> to vector<16xf32>
    %12 = vector.shape_cast %11 : vector<16xf32> to vector<16x1xf32>
    %13 = vector.broadcast %12 : vector<16x1xf32> to vector<16x128xf32>
    %14 = arith.subf %10, %13 : vector<16x128xf32>
    %15 = math.exp %14 : vector<16x128xf32>
    %cst_6 = arith.constant dense<0.000000e+00> : vector<16xf32>
    %16 = vector.multi_reduction <add>, %15, %cst_6 [1] : vector<16x128xf32> to vector<16xf32>
    %17 = vector.shape_cast %16 : vector<16xf32> to vector<16x1xf32>
    %c0_7 = arith.constant 0 : index
    %c0_8 = arith.constant 0 : index
    %18 = vector.load %arg3[%c0_7, %c0_8] : memref<128x128xf32, #tpu.memory_space<vmem>>, vector<128x128xf32>
    %cst_9 = arith.constant dense<0.000000e+00> : vector<16x128xf32>
    %19 = tpu.matmul %15, %18, %cst_9 {dimension_numbers = #tpu.dot_dimension_numbers<[1], [0], [0], [1], [0, 0, 1, 1], [], []>} : vector<16x128xf32>, vector<128x128xf32>, vector<16x128xf32> -> vector<16x128xf32>
    %20 = arith.mulf %19, %0 : vector<16x128xf32>
    %c0_10 = arith.constant 0 : index
    %c0_11 = arith.constant 0 : index
    %21 = vector.load %arg4[%c0_10, %c0_11] : memref<128x32xf32, #tpu.memory_space<vmem>>, vector<128x32xf32>
    %cst_12 = arith.constant dense<0.000000e+00> : vector<16x32xf32>
    %22 = tpu.matmul %20, %21, %cst_12 {dimension_numbers = #tpu.dot_dimension_numbers<[1], [0], [0], [1], [0, 0, 1, 1], [], []>} : vector<16x128xf32>, vector<128x32xf32>, vector<16x32xf32> -> vector<16x32xf32>
    %23 = tpu.reciprocal %17 {approx = true} : vector<16x1xf32> -> vector<16x1xf32>
    %24 = vector.broadcast %23 : vector<16x1xf32> to vector<16x32xf32>
    %25 = arith.mulf %22, %24 : vector<16x32xf32>
    %c0_13 = arith.constant 0 : index
    %c0_14 = arith.constant 0 : index
    %26 = vector.load %arg6[%c0_13, %c0_14] : memref<16x32xf32, #tpu.memory_space<vmem>>, vector<16x32xf32>
    tpu.vector_store %arg6[%c0_13, %c0_14], %25 {strides = array<i32>} : memref<16x32xf32, #tpu.memory_space<vmem>>, vector<16x32xf32>,
    return
  }
  func.func @transform_0(%arg0: i32) -> i32 {
    %c0_i32 = arith.constant 0 : i32
    %c0_i32_0 = arith.constant 0 : i32
    return %c0_i32 : i32
  }
  func.func @transform_1(%arg0: i32) -> (i32, i32) {
    %c0_i32 = arith.constant 0 : i32
    %c0_i32_0 = arith.constant 0 : i32
    %c0_i32_1 = arith.constant 0 : i32
    return %c0_i32, %c0_i32_0 : i32, i32
  }
  func.func @transform_2(%arg0: i32) -> (i32, i32) {
    %c0_i32 = arith.constant 0 : i32
    %c0_i32_0 = arith.constant 0 : i32
    %c0_i32_1 = arith.constant 0 : i32
    return %c0_i32, %c0_i32_0 : i32, i32
  }
  func.func @transform_3(%arg0: i32) -> (i32, i32) {
    %c0_i32 = arith.constant 0 : i32
    %c0_i32_0 = arith.constant 0 : i32
    %c0_i32_1 = arith.constant 0 : i32
    return %c0_i32, %c0_i32_0 : i32, i32
  }
  func.func @transform_4(%arg0: i32) -> (i32, i32) {
    %c0_i32 = arith.constant 0 : i32
    %c0_i32_0 = arith.constant 0 : i32
    return %arg0, %c0_i32 : i32, i32
  }
  func.func @transform_5(%arg0: i32) -> (i32, i32) {
    %c0_i32 = arith.constant 0 : i32
    %c0_i32_0 = arith.constant 0 : i32
    return %arg0, %c0_i32 : i32, i32
  }
}

</mosaic_0001>

<llo_original>
// kernel: agfw_forward.1
$region0: #{agfw_forward.1}
  #allocation0 [shape = 'u32[]', space=smem, size = 0x4, offset = 0x4, fixed_abs, tag = 'smem constant byte address 0x4 - core index']
  #allocation1 [shape = 'u32[144,128]{1,0:T(1,128)}', space=vmem, size = 0x12000, scoped, tag = 'internal scratch']
  #allocation2 [shape = 'f32[1]{0:T(128)S(6)}', space=smem, size = 0x200, scoped, tag = 'scoped memory for agfw_forward.1']
  %s0 = inlined_call_operand.<no memory space> [shape: f32[1], index: 0, kind: input, shape index: {}]
  %s1 = inlined_call_operand.vmem [shape: f32[128,128], index: 1, kind: input, shape index: {}]
  %s2 = inlined_call_operand.vmem [shape: f32[128,128], index: 2, kind: input, shape index: {}]
  %s3 = inlined_call_operand.vmem [shape: f32[128,32], index: 3, kind: input, shape index: {}]
  %s4 = inlined_call_operand.vmem [shape: f32[16,128], index: 4, kind: input, shape index: {}]
  %s5 = inlined_call_operand.hbm [shape: f32[16,32], index: 5, kind: output, shape index: {}]
  %s6 = sld [smem:[#allocation0]]
  $region30: #{agfw_forward.1} parent=0
    _
  %s8 = ssub.s32 1, %s6
  %s9 = scalar_select 0, %s8, %s6
  %10 = sst [smem:[#allocation2]] %s0
  $region1: #{agfw_forward.1} parent=0
    #allocation3 [shape = 'u8[8192]{0}', space=vmem, size = 0x2000, scoped, tag = 'output window, operand 0, single buffered']
    #allocation4 [shape = 's32[1]{0}', space=sflag, size = 0x4, scoped, tag = 'scoped memory for agfw_forward.1']
    %11 = vsyncpa [#allocation4], 0
    // Predicated region
    $region2: #{agfw_forward.1} parent=1 // pred_check
      _
    $region3: #{agfw_forward.1} parent=1 // pred_check_branch
      %13 = sbr.rel (0) target = $region5
    $region4: #{agfw_forward.1} parent=1 // pred_region
      _
    $region5: #{agfw_forward.1} parent=1 // pred_fallthru
      _
    // Predicated region
    $region6: #{agfw_forward.1} parent=1 // pred_check
      _
    $region7: #{agfw_forward.1} parent=1 // pred_check_branch
      %15 = sbr.rel (0) target = $region9
    $region8: #{agfw_forward.1} parent=1 // pred_region
      _
    $region9: #{agfw_forward.1} parent=1 // pred_fallthru
      _
    // Predicated region
    $region10: #{agfw_forward.1} parent=1 // pred_check
      _
    $region11: #{agfw_forward.1} parent=1 // pred_check_branch
      %17 = sbr.rel (0) target = $region13
    $region12: #{agfw_forward.1} parent=1 // pred_region
      _
    $region13: #{agfw_forward.1} parent=1 // pred_fallthru
      _
    // Predicated region
    $region14: #{agfw_forward.1} parent=1 // pred_check
      _
    $region15: #{agfw_forward.1} parent=1 // pred_check_branch
      %19 = sbr.rel (0) target = $region17
    $region16: #{agfw_forward.1} parent=1 // pred_region
      _
    $region17: #{agfw_forward.1} parent=1 // pred_fallthru
      _
    // Predicated region
    $region18: #{agfw_forward.1} parent=1 // pred_check
      _
    $region19: #{agfw_forward.1} parent=1 // pred_check_branch
      %21 = sbr.rel (0) target = $region21
    $region20: #{agfw_forward.1} parent=1 // pred_region
      _
    $region21: #{agfw_forward.1} parent=1 // pred_fallthru
      _
    %v22 = vld [vmem:[%s4] sm:$0xff]
    %v23 = vld [vmem:[%s4 + $0x8] sm:$0xff]
    %v24 = vld [vmem:[%s1] sm:$0xff]
    %v25 = vld [vmem:[%s1 + $0x8] sm:$0xff]
    %v26 = vld [vmem:[%s1 + $0x10] sm:$0xff]
    %v27 = vld [vmem:[%s1 + $0x18] sm:$0xff]
    %v28 = vld [vmem:[%s1 + $0x20] sm:$0xff]
    %v29 = vld [vmem:[%s1 + $0x28] sm:$0xff]
    %v30 = vld [vmem:[%s1 + $0x30] sm:$0xff]
    %v31 = vld [vmem:[%s1 + $0x38] sm:$0xff]
    %v32 = vld [vmem:[%s1 + $0x40] sm:$0xff]
    %v33 = vld [vmem:[%s1 + $0x48] sm:$0xff]
    %v34 = vld [vmem:[%s1 + $0x50] sm:$0xff]
    %v35 = vld [vmem:[%s1 + $0x58] sm:$0xff]
    %v36 = vld [vmem:[%s1 + $0x60] sm:$0xff]
    %v37 = vld [vmem:[%s1 + $0x68] sm:$0xff]
    %v38 = vld [vmem:[%s1 + $0x70] sm:$0xff]
    %v39 = vld [vmem:[%s1 + $0x78] sm:$0xff]
    %s40 = sld [smem:[#allocation2]]
    %v41 = vstv %s40
    %42 = vmatprep.subr.mxu0 0.0
    %43 = vmatpush1.msra.mxu0 %v39
    %44 = vmatprep.subr.mxu0 0.0
    %45 = vmatpush1.msra.mxu0 %v38
    %46 = vmatprep.subr.mxu0 0.0
    %47 = vmatpush1.msra.mxu0 %v37
    %48 = vmatprep.subr.mxu0 0.0
    %49 = vmatpush1.msra.mxu0 %v36
    %50 = vmatprep.subr.mxu0 0.0
    %51 = vmatpush1.msra.mxu0 %v35
    %52 = vmatprep.subr.mxu0 0.0
    %53 = vmatpush1.msra.mxu0 %v34
    %54 = vmatprep.subr.mxu0 0.0
    %55 = vmatpush1.msra.mxu0 %v33
    %56 = vmatprep.subr.mxu0 0.0
    %57 = vmatpush1.msra.mxu0 %v32
    %58 = vmatprep.subr.mxu0 0.0
    %59 = vmatpush1.msra.mxu0 %v31
    %60 = vmatprep.subr.mxu0 0.0
    %61 = vmatpush1.msra.mxu0 %v30
    %62 = vmatprep.subr.mxu0 0.0
    %63 = vmatpush1.msra.mxu0 %v29
    %64 = vmatprep.subr.mxu0 0.0
    %65 = vmatpush1.msra.mxu0 %v28
    %66 = vmatprep.subr.mxu0 0.0
    %67 = vmatpush1.msra.mxu0 %v27
    %68 = vmatprep.subr.mxu0 0.0
    %69 = vmatpush1.msra.mxu0 %v26
    %70 = vmatprep.subr.mxu0 0.0
    %71 = vmatpush1.msra.mxu0 %v25
    %72 = vmatprep.subr.mxu0 0.0
    %73 = vmatpush1.msra.mxu0 %v24
    %74 = vmatprep.subr.mxu0 0.0
    %75 = vmatpush2.msra.mxu0 0.0
    %76 = vmatprep.subr.mxu0 0.0
    %77 = vmatpush2.msra.mxu0 0.0
    %78 = vmatprep.subr.mxu0 0.0
    %79 = vmatpush2.msra.mxu0 0.0
    %80 = vmatprep.subr.mxu0 0.0
    %81 = vmatpush2.msra.mxu0 0.0
    %82 = vmatprep.subr.mxu0 0.0
    %83 = vmatpush2.msra.mxu0 0.0
    %84 = vmatprep.subr.mxu0 0.0
    %85 = vmatpush2.msra.mxu0 0.0
    %86 = vmatprep.subr.mxu0 0.0
    %87 = vmatpush2.msra.mxu0 0.0
    %88 = vmatprep.subr.mxu0 0.0
    %89 = vmatpush2.msra.mxu0 0.0
    %90 = vmatprep.subr.mxu0 0.0
    %91 = vmatpush2.msra.mxu0 0.0
    %92 = vmatprep.subr.mxu0 0.0
    %93 = vmatpush2.msra.mxu0 0.0
    %94 = vmatprep.subr.mxu0 0.0
    %95 = vmatpush2.msra.mxu0 0.0
    %96 = vmatprep.subr.mxu0 0.0
    %97 = vmatpush2.msra.mxu0 0.0
    %98 = vmatprep.subr.mxu0 0.0
    %99 = vmatpush2.msra.mxu0 0.0
    %100 = vmatprep.subr.mxu0 0.0
    %101 = vmatpush2.msra.mxu0 0.0
    %102 = vmatprep.subr.mxu0 0.0
    %103 = vmatpush2.msra.mxu0 0.0
    %104 = vmatprep.subr.mxu0 0.0
    %105 = vmatpush2.msra.mxu0 0.0
    %106 = vmatprep.mubr.f32.mxu0 0.0
    %107 = vmatmul.mubr.f32.gmra.mxu0 %v22
    %v108 = vpop.f32.mrf.mxu0
    %v109 = vadd.f32 %v41, %v108
    %v110 = vpop.f32.mrf.mxu0
    %111 = vmatprep.mubr.f32.mxu0 0.0
    %112 = vmatmul.mubr.f32.gmra.mxu0 %v23
    %v113 = vpop.f32.mrf.mxu0
    %v114 = vadd.f32 %v41, %v113
    %v115 = vpop.f32.mrf.mxu0
    %116 = vdwg.mxu0
    %v117 = vlaneseq
    %v118 = vand.u32 %v117, 127
    %vm119 = vcmp.lt.s32.totalorder %v118, 4
    %v120 = vsel %vm119, %v109, -1e+30
    %v121 = vsel %vm119, %v114, -1e+30
    %122 = vmax.xlane.f32.xlu0 %v120
    %v123 = vpop.xlane.xlu0 %122
    %124 = vmax.xlane.f32.xlu0 %v121
    %v125 = vpop.xlane.xlu0 %124
    %v126 = vsub.f32 %v120, %v123
    %v127 = vsub.f32 %v121, %v125
    %v128 = vmul.f32 %v126, 1.442695
    %v129 = vpow.pop %v128
    %v130 = vmul.f32 %v127, 1.442695
    %v131 = vpow.pop %v130
    %132 = vadd.xlane.f32.xlu0 %v129
    %v133 = vpop.xlane.xlu0 %132
    %134 = vadd.xlane.f32.xlu0 %v131
    %v135 = vpop.xlane.xlu0 %134
    %v136 = vld [vmem:[%s2] sm:$0xff]
    %v137 = vld [vmem:[%s2 + $0x8] sm:$0xff]
    %v138 = vld [vmem:[%s2 + $0x10] sm:$0xff]
    %v139 = vld [vmem:[%s2 + $0x18] sm:$0xff]
    %v140 = vld [vmem:[%s2 + $0x20] sm:$0xff]
    %v141 = vld [vmem:[%s2 + $0x28] sm:$0xff]
    %v142 = vld [vmem:[%s2 + $0x30] sm:$0xff]
    %v143 = vld [vmem:[%s2 + $0x38] sm:$0xff]
    %v144 = vld [vmem:[%s2 + $0x40] sm:$0xff]
    %v145 = vld [vmem:[%s2 + $0x48] sm:$0xff]
    %v146 = vld [vmem:[%s2 + $0x50] sm:$0xff]
    %v147 = vld [vmem:[%s2 + $0x58] sm:$0xff]
    %v148 = vld [vmem:[%s2 + $0x60] sm:$0xff]
    %v149 = vld [vmem:[%s2 + $0x68] sm:$0xff]
    %v150 = vld [vmem:[%s2 + $0x70] sm:$0xff]
    %v151 = vld [vmem:[%s2 + $0x78] sm:$0xff]
    %152 = vmatprep.subr.mxu0 0.0
    %153 = vmatpush1.msra.mxu0 %v151
    %154 = vmatprep.subr.mxu0 0.0
    %155 = vmatpush1.msra.mxu0 %v150
    %156 = vmatprep.subr.mxu0 0.0
    %157 = vmatpush1.msra.mxu0 %v149
    %158 = vmatprep.subr.mxu0 0.0
    %159 = vmatpush1.msra.mxu0 %v148
    %160 = vmatprep.subr.mxu0 0.0
    %161 = vmatpush1.msra.mxu0 %v147
    %162 = vmatprep.subr.mxu0 0.0
    %163 = vmatpush1.msra.mxu0 %v146
    %164 = vmatprep.subr.mxu0 0.0
    %165 = vmatpush1.msra.mxu0 %v145
    %166 = vmatprep.subr.mxu0 0.0
    %167 = vmatpush1.msra.mxu0 %v144
    %168 = vmatprep.subr.mxu0 0.0
    %169 = vmatpush1.msra.mxu0 %v143
    %170 = vmatprep.subr.mxu0 0.0
    %171 = vmatpush1.msra.mxu0 %v142
    %172 = vmatprep.subr.mxu0 0.0
    %173 = vmatpush1.msra.mxu0 %v141
    %174 = vmatprep.subr.mxu0 0.0
    %175 = vmatpush1.msra.mxu0 %v140
    %176 = vmatprep.subr.mxu0 0.0
    %177 = vmatpush1.msra.mxu0 %v139
    %178 = vmatprep.subr.mxu0 0.0
    %179 = vmatpush1.msra.mxu0 %v138
    %180 = vmatprep.subr.mxu0 0.0
    %181 = vmatpush1.msra.mxu0 %v137
    %182 = vmatprep.subr.mxu0 0.0
    %183 = vmatpush1.msra.mxu0 %v136
    %184 = vmatprep.subr.mxu0 0.0
    %185 = vmatpush2.msra.mxu0 0.0
    %186 = vmatprep.subr.mxu0 0.0
    %187 = vmatpush2.msra.mxu0 0.0
    %188 = vmatprep.subr.mxu0 0.0
    %189 = vmatpush2.msra.mxu0 0.0
    %190 = vmatprep.subr.mxu0 0.0
    %191 = vmatpush2.msra.mxu0 0.0
    %192 = vmatprep.subr.mxu0 0.0
    %193 = vmatpush2.msra.mxu0 0.0
    %194 = vmatprep.subr.mxu0 0.0
    %195 = vmatpush2.msra.mxu0 0.0
    %196 = vmatprep.subr.mxu0 0.0
    %197 = vmatpush2.msra.mxu0 0.0
    %198 = vmatprep.subr.mxu0 0.0
    %199 = vmatpush2.msra.mxu0 0.0
    %200 = vmatprep.subr.mxu0 0.0
    %201 = vmatpush2.msra.mxu0 0.0
    %202 = vmatprep.subr.mxu0 0.0
    %203 = vmatpush2.msra.mxu0 0.0
    %204 = vmatprep.subr.mxu0 0.0
    %205 = vmatpush2.msra.mxu0 0.0
    %206 = vmatprep.subr.mxu0 0.0
    %207 = vmatpush2.msra.mxu0 0.0
    %208 = vmatprep.subr.mxu0 0.0
    %209 = vmatpush2.msra.mxu0 0.0
    %210 = vmatprep.subr.mxu0 0.0
    %211 = vmatpush2.msra.mxu0 0.0
    %212 = vmatprep.subr.mxu0 0.0
    %213 = vmatpush2.msra.mxu0 0.0
    %214 = vmatprep.subr.mxu0 0.0
    %215 = vmatpush2.msra.mxu0 0.0
    %216 = vmatprep.mubr.f32.mxu0 0.0
    %217 = vmatmul.mubr.f32.gmra.mxu0 %v129
    %v218 = vpop.f32.mrf.mxu0
    %v219 = vadd.f32 0.0, %v218
    %v220 = vpop.f32.mrf.mxu0
    %221 = vmatprep.mubr.f32.mxu0 0.0
    %222 = vmatmul.mubr.f32.gmra.mxu0 %v131
    %v223 = vpop.f32.mrf.mxu0
    %v224 = vadd.f32 0.0, %v223
    %v225 = vpop.f32.mrf.mxu0
    %226 = vdwg.mxu0
    %v227 = vmul.f32 %v219, %v22
    %v228 = vmul.f32 %v224, %v23
    %v229 = vld [vmem:[%s3] sm:$0xff]
    %v230 = vld [vmem:[%s3 + $0x8] sm:$0xff]
    %v231 = vld [vmem:[%s3 + $0x10] sm:$0xff]
    %v232 = vld [vmem:[%s3 + $0x18] sm:$0xff]
    %v233 = vld [vmem:[%s3 + $0x20] sm:$0xff]
    %v234 = vld [vmem:[%s3 + $0x28] sm:$0xff]
    %v235 = vld [vmem:[%s3 + $0x30] sm:$0xff]
    %v236 = vld [vmem:[%s3 + $0x38] sm:$0xff]
    %v237 = vld [vmem:[%s3 + $0x40] sm:$0xff]
    %v238 = vld [vmem:[%s3 + $0x48] sm:$0xff]
    %v239 = vld [vmem:[%s3 + $0x50] sm:$0xff]
    %v240 = vld [vmem:[%s3 + $0x58] sm:$0xff]
    %v241 = vld [vmem:[%s3 + $0x60] sm:$0xff]
    %v242 = vld [vmem:[%s3 + $0x68] sm:$0xff]
    %v243 = vld [vmem:[%s3 + $0x70] sm:$0xff]
    %v244 = vld [vmem:[%s3 + $0x78] sm:$0xff]
    %245 = vmatprep.subr.mxu0 0.0
    %246 = vmatpush1.msra.mxu0 %v244
    %247 = vmatprep.subr.mxu0 0.0
    %248 = vmatpush1.msra.mxu0 %v243
    %249 = vmatprep.subr.mxu0 0.0
    %250 = vmatpush1.msra.mxu0 %v242
    %251 = vmatprep.subr.mxu0 0.0
    %252 = vmatpush1.msra.mxu0 %v241
    %253 = vmatprep.subr.mxu0 0.0
    %254 = vmatpush1.msra.mxu0 %v240
    %255 = vmatprep.subr.mxu0 0.0
    %256 = vmatpush1.msra.mxu0 %v239
    %257 = vmatprep.subr.mxu0 0.0
    %258 = vmatpush1.msra.mxu0 %v238
    %259 = vmatprep.subr.mxu0 0.0
    %260 = vmatpush1.msra.mxu0 %v237
    %261 = vmatprep.subr.mxu0 0.0
    %262 = vmatpush1.msra.mxu0 %v236
    %263 = vmatprep.subr.mxu0 0.0
    %264 = vmatpush1.msra.mxu0 %v235
    %265 = vmatprep.subr.mxu0 0.0
    %266 = vmatpush1.msra.mxu0 %v234
    %267 = vmatprep.subr.mxu0 0.0
    %268 = vmatpush1.msra.mxu0 %v233
    %269 = vmatprep.subr.mxu0 0.0
    %270 = vmatpush1.msra.mxu0 %v232
    %271 = vmatprep.subr.mxu0 0.0
    %272 = vmatpush1.msra.mxu0 %v231
    %273 = vmatprep.subr.mxu0 0.0
    %274 = vmatpush1.msra.mxu0 %v230
    %275 = vmatprep.subr.mxu0 0.0
    %276 = vmatpush1.msra.mxu0 %v229
    %277 = vmatprep.subr.mxu0 0.0
    %278 = vmatpush2.msra.mxu0 0.0
    %279 = vmatprep.subr.mxu0 0.0
    %280 = vmatpush2.msra.mxu0 0.0
    %281 = vmatprep.subr.mxu0 0.0
    %282 = vmatpush2.msra.mxu0 0.0
    %283 = vmatprep.subr.mxu0 0.0
    %284 = vmatpush2.msra.mxu0 0.0
    %285 = vmatprep.subr.mxu0 0.0
    %286 = vmatpush2.msra.mxu0 0.0
    %287 = vmatprep.subr.mxu0 0.0
    %288 = vmatpush2.msra.mxu0 0.0
    %289 = vmatprep.subr.mxu0 0.0
    %290 = vmatpush2.msra.mxu0 0.0
    %291 = vmatprep.subr.mxu0 0.0
    %292 = vmatpush2.msra.mxu0 0.0
    %293 = vmatprep.subr.mxu0 0.0
    %294 = vmatpush2.msra.mxu0 0.0
    %295 = vmatprep.subr.mxu0 0.0
    %296 = vmatpush2.msra.mxu0 0.0
    %297 = vmatprep.subr.mxu0 0.0
    %298 = vmatpush2.msra.mxu0 0.0
    %299 = vmatprep.subr.mxu0 0.0
    %300 = vmatpush2.msra.mxu0 0.0
    %301 = vmatprep.subr.mxu0 0.0
    %302 = vmatpush2.msra.mxu0 0.0
    %303 = vmatprep.subr.mxu0 0.0
    %304 = vmatpush2.msra.mxu0 0.0
    %305 = vmatprep.subr.mxu0 0.0
    %306 = vmatpush2.msra.mxu0 0.0
    %307 = vmatprep.subr.mxu0 0.0
    %308 = vmatpush2.msra.mxu0 0.0
    %309 = vmatprep.mubr.f32.mxu0 0.0
    %310 = vmatmul.mubr.f32.gmra.mxu0 %v227
    %v311 = vpop.f32.mrf.mxu0
    %v312 = vadd.f32 0.0, %v311
    %v313 = vpop.f32.mrf.mxu0
    %314 = vmatprep.mubr.f32.mxu0 0.0
    %315 = vmatmul.mubr.f32.gmra.mxu0 %v228
    %v316 = vpop.f32.mrf.mxu0
    %v317 = vadd.f32 0.0, %v316
    %v318 = vpop.f32.mrf.mxu0
    %319 = vdwg.mxu0
    %v320 = vrcp.pop %v133
    %v321 = vrcp.pop %v135
    %v322 = vmul.f32 %v312, %v320
    %v323 = vmul.f32 %v317, %v321
    %vm324 = vcmask 261120
    %325 = vst.msk [vmem:[#allocation3] sm:$0xff] %vm324, %v322
    %326 = vst.msk [vmem:[#allocation3 + $0x8] sm:$0xff] %vm324, %v323
    // Predicated region
    $region22: #{agfw_forward.1} parent=1 // pred_check
      _
    $region23: #{agfw_forward.1} parent=1 // pred_check_branch
      %328 = sbr.rel (0) target = $region25
    $region24: #{agfw_forward.1} parent=1 // pred_region
      %s330 = ssub.s32 256, 256
      %331 = vsyncadd [#allocation4], %s330
      %s332 = sshll.u32 [#allocation3], 4
      %s333 = int_to_ptr.vmem [resolvable:$true] %s332
      %338 = dma.vmem_to_hbm [thread:$0]  %s333, 256, %s5, [#allocation4], 128, 128, 8
    $region25: #{agfw_forward.1} parent=1 // pred_fallthru
      _
    // Predicated region
    $region26: #{agfw_forward.1} parent=1 // pred_check
      _
    $region27: #{agfw_forward.1} parent=1 // pred_check_branch
      %340 = sbr.rel (0) target = $region29
    $region28: #{agfw_forward.1} parent=1 // pred_region
      %341 = dma.done [#allocation4], 256
    $region29: #{agfw_forward.1} parent=1 // pred_fallthru
      _
    %342 = vsyncpa [#allocation4], 1

</llo_original>
